<compile_context>
chip_gen: v6e
topology: v6e:2x2x1
jax: 0.10.0
libtpu: 0.0.40
codegen_flags: <defaults>
</compile_context>

<pallas_src>
import functools

import jax
import jax.numpy as jnp
from jax import lax
from jax.experimental import pallas as pl
from jax.experimental.pallas import tpu as pltpu

_SUBLANES = 8
_LANES = 128
_MAX_ROW_TILE = 1024


@functools.lru_cache(maxsize=1)
def _vmem_budgets():
    """Returns (vmem_limit_bytes, tile_budget_bytes) for this TPU generation.

    tile_budget covers the double-buffered input blocks *plus* the f32
    intermediates the kernel materializes (see _per_row_bytes).
    """
    cap = None
    try:
        cap = getattr(pltpu.get_tpu_info(), "vmem_capacity_bytes", None)
    except Exception:
        cap = None
    if cap is not None and cap >= 96 * 1024 * 1024:
        # 128 MiB parts (v5e/v6e).  v5e's *default* scoped limit is 16 MiB, so
        # the explicit vmem_limit_bytes below is mandatory there.
        return 64 * 1024 * 1024, 32 * 1024 * 1024
    # 64 MiB per-TC parts (v7x) or unknown: conservative, spill-free sizing.
    return 48 * 1024 * 1024, 12 * 1024 * 1024


def _per_row_bytes(c, in_dtype, tgt_dtype, mask_cols=0, mask_dtype=jnp.float32):
    """VMEM bytes per row: double-buffered inputs + in-kernel f32 intermediates."""
    io = 2 * c * (jnp.dtype(in_dtype).itemsize + jnp.dtype(tgt_dtype).itemsize)
    if mask_cols:
        io += 2 * mask_cols * jnp.dtype(mask_dtype).itemsize
    # Fused kernel still holds ~x_sh, t_exp, their product, and an upcast tile.
    intermediates = 4 * c * 4
    if mask_cols > 1:
        intermediates += 2 * mask_cols * 4      # m upcast + t_exp*m
    return io + intermediates


def _choose_row_tile(n, per_row_bytes, tile_budget):
    """Largest multiple-of-8 row tile fitting the budget (capped at 1024, <= N)."""
    if n < _SUBLANES:
        return max(int(n), 1)                   # full-array block for tiny N
    cap_vmem = max(_SUBLANES,
                   (tile_budget // max(per_row_bytes, 1)) // _SUBLANES * _SUBLANES)
    cap_n = (n // _SUBLANES) * _SUBLANES
    return int(min(_MAX_ROW_TILE, cap_vmem, cap_n))


def _row_terms(x, t):
    """Per-row pieces of the fused soft-CE:  x_sh, x_lse, t_exp, t_sum (f32)."""
    x_max = jnp.max(x, axis=-1, keepdims=True)
    x_sh = x - x_max
    x_lse = jnp.log(jnp.sum(jnp.exp(x_sh), axis=-1, keepdims=True))   # (rt,1)

    t_max = jnp.max(t, axis=-1, keepdims=True)
    t_exp = jnp.exp(t - t_max)
    t_sum = jnp.sum(t_exp, axis=-1, keepdims=True)                    # (rt,1)
    return x_sh, x_lse, t_exp, t_sum


def _soft_ce_kernel_nomask(inp_ref, tgt_ref, out_ref, *, n_rows):
    """One (row_tile, C) tile -> one scalar partial in an aligned (1,8,128) block."""
    i = pl.program_id(0)
    rt = inp_ref.shape[0]

    x = inp_ref[...].astype(jnp.float32)
    t = tgt_ref[...].astype(jnp.float32)

    x_sh, x_lse, t_exp, t_sum = _row_terms(x, t)
    #   sum_c[(x_lse - x_sh) * t_exp / t_sum]  ==  x_lse - dot / t_sum
    dot = jnp.sum(x_sh * t_exp, axis=-1, keepdims=True)               # (rt,1)
    loss_row = x_lse - dot / t_sum                                    # (rt,1)

    has_tail = (n_rows % rt) != 0          # static: only ragged N pays for this
    if has_tail:
        row_ids = i * rt + lax.broadcasted_iota(jnp.int32, (rt, 1), 0)
        # select (not multiply): garbage/NaN in padded tail rows cannot leak.
        loss_row = jnp.where(row_ids < n_rows, loss_row, 0.0)

    out_ref[...] = jnp.broadcast_to(jnp.sum(loss_row), out_ref.shape)


def _soft_ce_kernel_masked(inp_ref, tgt_ref, mask_ref, num_ref, den_ref, *,
                           n_rows, per_row_mask):
    """Masked variant; mask block is (row_tile, 1) or (row_tile, C)."""
    i = pl.program_id(0)
    rt = inp_ref.shape[0]

    x = inp_ref[...].astype(jnp.float32)
    t = tgt_ref[...].astype(jnp.float32)
    m = mask_ref[...].astype(jnp.float32)

    x_sh, x_lse, t_exp, t_sum = _row_terms(x, t)

    if per_row_mask:
        # (rt,1) mask: apply after the class-axis reduction (same cost as nomask).
        dot = jnp.sum(x_sh * t_exp, axis=-1, keepdims=True)
        num_row = (x_lse - dot / t_sum) * m                           # (rt,1)
        den_row = m                                                   # (rt,1)
    else:
        # Full (rt,C) mask: fold it into the t_exp weights before reducing.
        #   sum_c[(x_lse - x_sh) * t_exp * m] / t_sum
        #     == (x_lse * sum_c(t_exp*m) - sum_c(x_sh*t_exp*m)) / t_sum
        tm = t_exp * m
        tm_sum = jnp.sum(tm, axis=-1, keepdims=True)
        dot_tm = jnp.sum(x_sh * tm, axis=-1, keepdims=True)
        num_row = (x_lse * tm_sum - dot_tm) / t_sum                   # (rt,1)
        den_row = jnp.sum(m, axis=-1, keepdims=True)                  # (rt,1)

    has_tail = (n_rows % rt) != 0
    if has_tail:
        row_ids = i * rt + lax.broadcasted_iota(jnp.int32, (rt, 1), 0)
        row_valid = row_ids < n_rows
        num_row = jnp.where(row_valid, num_row, 0.0)
        den_row = jnp.where(row_valid, den_row, 0.0)

    num_ref[...] = jnp.broadcast_to(jnp.sum(num_row), num_ref.shape)
    den_ref[...] = jnp.broadcast_to(jnp.sum(den_row), den_ref.shape)


@functools.partial(jax.jit, static_argnames=("row_tile",))
def _soft_ce_nomask_call(inp, tgt, row_tile):
    n, c = inp.shape
    num_blocks = pl.cdiv(n, row_tile)
    vmem_limit, _ = _vmem_budgets()
    kernel = functools.partial(_soft_ce_kernel_nomask, n_rows=n)
    partials = pl.pallas_call(
        kernel,
        out_shape=jax.ShapeDtypeStruct((num_blocks, _SUBLANES, _LANES), jnp.float32),
        grid_spec=pltpu.PrefetchScalarGridSpec(
            num_scalar_prefetch=0,
            grid=(num_blocks,),
            in_specs=[
                pl.BlockSpec((row_tile, c), lambda i: (i, 0)),
                pl.BlockSpec((row_tile, c), lambda i: (i, 0)),
            ],
            out_specs=pl.BlockSpec((1, _SUBLANES, _LANES), lambda i: (i, 0, 0)),
        ),
        compiler_params=pltpu.CompilerParams(
            dimension_semantics=("parallel",),     # no carried state -> megacore split
            vmem_limit_bytes=vmem_limit,
        ),
    )(inp, tgt)
    return jnp.sum(partials[:, 0, 0])


@functools.partial(jax.jit, static_argnames=("row_tile",))
def _soft_ce_masked_call(inp, tgt, mask, row_tile):
    n, c = inp.shape
    mc = mask.shape[1]
    num_blocks = pl.cdiv(n, row_tile)
    vmem_limit, _ = _vmem_budgets()
    kernel = functools.partial(_soft_ce_kernel_masked, n_rows=n,
                               per_row_mask=(mc == 1))
    num_p, den_p = pl.pallas_call(
        kernel,
        out_shape=(
            jax.ShapeDtypeStruct((num_blocks, _SUBLANES, _LANES), jnp.float32),
            jax.ShapeDtypeStruct((num_blocks, _SUBLANES, _LANES), jnp.float32),
        ),
        grid_spec=pltpu.PrefetchScalarGridSpec(
            num_scalar_prefetch=0,
            grid=(num_blocks,),
            in_specs=[
                pl.BlockSpec((row_tile, c), lambda i: (i, 0)),
                pl.BlockSpec((row_tile, c), lambda i: (i, 0)),
                pl.BlockSpec((row_tile, mc), lambda i: (i, 0)),
            ],
            out_specs=[
                pl.BlockSpec((1, _SUBLANES, _LANES), lambda i: (i, 0, 0)),
                pl.BlockSpec((1, _SUBLANES, _LANES), lambda i: (i, 0, 0)),
            ],
        ),
        compiler_params=pltpu.CompilerParams(
            dimension_semantics=("parallel",),
            vmem_limit_bytes=vmem_limit,
        ),
    )(inp, tgt, mask)
    return jnp.sum(num_p[:, 0, 0]), jnp.sum(den_p[:, 0, 0])


def soft_cross_entropy(input_logits, target_logits, mask=None, row_tile=None):
    """JAX/Pallas equivalent of SoftCrossEntropy.forward (returns a scalar f32)."""
    inp = jnp.asarray(input_logits)
    tgt = jnp.asarray(target_logits)
    # Keep float inputs in their native dtype (bf16 streams at half the HBM
    # bytes; kernel upcasts to f32).  Only non-float inputs get a wrapper cast.
    if not jnp.issubdtype(inp.dtype, jnp.floating):
        inp = inp.astype(jnp.float32)
    if not jnp.issubdtype(tgt.dtype, jnp.floating):
        tgt = tgt.astype(jnp.float32)
    n, c = tgt.shape
    _, tile_budget = _vmem_budgets()

    if mask is None:
        if row_tile is None:
            row_tile = _choose_row_tile(
                n, _per_row_bytes(c, inp.dtype, tgt.dtype), tile_budget)
        num = _soft_ce_nomask_call(inp, tgt, row_tile)
        return num / jnp.float32(n)          # PyTorch: divide by N when mask is None

    m = jnp.asarray(mask)
    if not jnp.issubdtype(m.dtype, jnp.floating):
        m = m.astype(jnp.float32)
    # NOTE: a 1-D mask is treated as per-sample, i.e. like an (N,1) mask passed
    # to the torch module (denominator = sum over N).  Callers that pre-expand
    # the mask to (N,C) in torch get a denominator C x larger; pass the same
    # shape here to match.
    if m.ndim == 1:
        m = m[:, None]
    if m.ndim != 2 or m.shape[0] != n or m.shape[1] not in (1, c):
        m = jnp.broadcast_to(m, (n, c))      # fallback: materialize full mask
    if row_tile is None:
        row_tile = _choose_row_tile(
            n, _per_row_bytes(c, inp.dtype, tgt.dtype, m.shape[1], m.dtype),
            tile_budget)
    num, den = _soft_ce_masked_call(inp, tgt, m, row_tile)
    return num / den                         # PyTorch: divide by sum(mask)


def _reference(input_logits, target_logits, mask=None):
    log_lik = -jax.nn.log_softmax(input_logits, axis=1)
    t_sm = jax.nn.softmax(target_logits, axis=1)
    if mask is None:
        return jnp.sum(log_lik * t_sm) / target_logits.shape[0]
    return jnp.sum(log_lik * t_sm * mask) / jnp.sum(mask)


if __name__ == "__main__":
    key = jax.random.PRNGKey(0)
    k1, k2, k3, k4 = jax.random.split(key, 4)

    N, C = 8, 32
    inp = jax.random.normal(k1, (N, C), jnp.float32)
    tgt = jax.random.normal(k2, (N, C), jnp.float32)

    # mask=None path
    loss = jax.block_until_ready(soft_cross_entropy(inp, tgt))
    ref = _reference(inp, tgt)
    assert jnp.allclose(loss, ref, rtol=1e-5, atol=1e-5), (loss, ref)

    # full (N, C) mask path
    mask = (jax.random.uniform(k3, (N, C)) > 0.5).astype(jnp.float32)
    loss_m = jax.block_until_ready(soft_cross_entropy(inp, tgt, mask))
    ref_m = _reference(inp, tgt, mask)
    assert jnp.allclose(loss_m, ref_m, rtol=1e-5, atol=1e-5), (loss_m, ref_m)

    # bf16 logits pass straight through (in-kernel f32 upcast)
    loss_b = jax.block_until_ready(
        soft_cross_entropy(inp.astype(jnp.bfloat16), tgt.astype(jnp.bfloat16)))
    ref_b = _reference(inp.astype(jnp.bfloat16).astype(jnp.float32),
                       tgt.astype(jnp.bfloat16).astype(jnp.float32))
    assert jnp.allclose(loss_b, ref_b, rtol=1e-5, atol=1e-5), (loss_b, ref_b)

    # ragged N (exercises the per-row tail select, no wrapper pad)
    N2 = 13
    inp2 = jax.random.normal(k1, (N2, C), jnp.float32)
    tgt2 = jax.random.normal(k2, (N2, C), jnp.float32)
    loss2 = jax.block_until_ready(soft_cross_entropy(inp2, tgt2))
    ref2 = _reference(inp2, tgt2)
    assert jnp.allclose(loss2, ref2, rtol=1e-5, atol=1e-5), (loss2, ref2)

    # per-row (N, 1) mask on the ragged shape (fast per-row mask path)
    rmask = (jax.random.uniform(k4, (N2, 1)) > 0.3).astype(jnp.float32)
    loss2m = jax.block_until_ready(soft_cross_entropy(inp2, tgt2, rmask))
    ref2m = _reference(inp2, tgt2, rmask)
    assert jnp.allclose(loss2m, ref2m, rtol=1e-5, atol=1e-5), (loss2m, ref2m)

    print("KERNEL_OK")
</pallas_src>

<mosaic_0001>
module attributes {stable_mosaic.version = 11 : i64} {
  func.func @_soft_ce_kernel_nomask(%arg0: i32, %arg1: memref<8x32xf32, #tpu.memory_space<vmem>>, %arg2: memref<8x32xf32, #tpu.memory_space<vmem>>, %arg3: memref<1x8x128xf32, #tpu.memory_space<vmem>>) attributes {dimension_semantics = [#tpu.dimension_semantics<parallel>], iteration_bounds = array<i64: 1>, scalar_prefetch = 0 : i64, scratch_operands = 0 : i64, tpu.core_type = #tpu.core_type<tc>, window_params = [{transform_indices = @transform_0, window_bounds = array<i64: 8, 32>}, {transform_indices = @transform_1, window_bounds = array<i64: 8, 32>}, {transform_indices = @transform_2, window_bounds = array<i64: 1, 8, 128>}]} {
    %c0 = arith.constant 0 : index
    %c0_0 = arith.constant 0 : index
    %0 = vector.load %arg1[%c0, %c0_0] : memref<8x32xf32, #tpu.memory_space<vmem>>, vector<8x32xf32>
    %c0_1 = arith.constant 0 : index
    %c0_2 = arith.constant 0 : index
    %1 = vector.load %arg2[%c0_1, %c0_2] : memref<8x32xf32, #tpu.memory_space<vmem>>, vector<8x32xf32>
    %cst = arith.constant dense<0xFF800000> : vector<8xf32>
    %2 = vector.multi_reduction <maximumf>, %0, %cst [1] : vector<8x32xf32> to vector<8xf32>
    %3 = vector.shape_cast %2 : vector<8xf32> to vector<8x1xf32>
    %4 = vector.broadcast %3 : vector<8x1xf32> to vector<8x32xf32>
    %5 = arith.subf %0, %4 : vector<8x32xf32>
    %6 = math.exp %5 : vector<8x32xf32>
    %cst_3 = arith.constant dense<0.000000e+00> : vector<8xf32>
    %7 = vector.multi_reduction <add>, %6, %cst_3 [1] : vector<8x32xf32> to vector<8xf32>
    %8 = vector.shape_cast %7 : vector<8xf32> to vector<8x1xf32>
    %9 = math.log %8 : vector<8x1xf32>
    %cst_4 = arith.constant dense<0xFF800000> : vector<8xf32>
    %10 = vector.multi_reduction <maximumf>, %1, %cst_4 [1] : vector<8x32xf32> to vector<8xf32>
    %11 = vector.shape_cast %10 : vector<8xf32> to vector<8x1xf32>
    %12 = vector.broadcast %11 : vector<8x1xf32> to vector<8x32xf32>
    %13 = arith.subf %1, %12 : vector<8x32xf32>
    %14 = math.exp %13 : vector<8x32xf32>
    %cst_5 = arith.constant dense<0.000000e+00> : vector<8xf32>
    %15 = vector.multi_reduction <add>, %14, %cst_5 [1] : vector<8x32xf32> to vector<8xf32>
    %16 = vector.shape_cast %15 : vector<8xf32> to vector<8x1xf32>
    %17 = arith.mulf %5, %14 : vector<8x32xf32>
    %cst_6 = arith.constant dense<0.000000e+00> : vector<8xf32>
    %18 = vector.multi_reduction <add>, %17, %cst_6 [1] : vector<8x32xf32> to vector<8xf32>
    %19 = vector.shape_cast %18 : vector<8xf32> to vector<8x1xf32>
    %20 = arith.divf %19, %16 : vector<8x1xf32>
    %21 = arith.subf %9, %20 : vector<8x1xf32>
    %22 = vector.shape_cast %21 : vector<8x1xf32> to vector<1x8x1xf32>
    %cst_7 = arith.constant dense<0.000000e+00> : vector<1xf32>
    %23 = vector.multi_reduction <add>, %22, %cst_7 [1, 2] : vector<1x8x1xf32> to vector<1xf32>
    %24 = vector.shape_cast %23 : vector<1xf32> to vector<1x1x1xf32>
    %25 = vector.extract %24[0, 0, 0] : f32 from vector<1x1x1xf32>
    %26 = vector.broadcast %25 : f32 to vector<1x8x128xf32>
    %c0_8 = arith.constant 0 : index
    %c0_9 = arith.constant 0 : index
    %c0_10 = arith.constant 0 : index
    %27 = vector.load %arg3[%c0_8, %c0_9, %c0_10] : memref<1x8x128xf32, #tpu.memory_space<vmem>>, vector<1x8x128xf32>
    tpu.vector_store %arg3[%c0_8, %c0_9, %c0_10], %26 {strides = array<i32>} : memref<1x8x128xf32, #tpu.memory_space<vmem>>, vector<1x8x128xf32>,
    return
  }
  func.func @transform_0(%arg0: i32) -> (i32, i32) {
    %c0_i32 = arith.constant 0 : i32
    %c0_i32_0 = arith.constant 0 : i32
    return %arg0, %c0_i32 : i32, i32
  }
  func.func @transform_1(%arg0: i32) -> (i32, i32) {
    %c0_i32 = arith.constant 0 : i32
    %c0_i32_0 = arith.constant 0 : i32
    return %arg0, %c0_i32 : i32, i32
  }
  func.func @transform_2(%arg0: i32) -> (i32, i32, i32) {
    %c0_i32 = arith.constant 0 : i32
    %c0_i32_0 = arith.constant 0 : i32
    %c0_i32_1 = arith.constant 0 : i32
    return %arg0, %c0_i32, %c0_i32_0 : i32, i32, i32
  }
}

</mosaic_0001>

<llo_original>
// kernel: _soft_ce_nomask_call.1
$region0: #{_soft_ce_nomask_call.1}
  #allocation0 [shape = 'u32[]', space=smem, size = 0x4, offset = 0x4, fixed_abs, tag = 'smem constant byte address 0x4 - core index']
  #allocation1 [shape = 'u32[144,128]{1,0:T(1,128)}', space=vmem, size = 0x12000, scoped, tag = 'internal scratch']
  %s0 = inlined_call_operand.hbm [shape: f32[8,32], index: 0, kind: input, shape index: {}]
  %s1 = inlined_call_operand.hbm [shape: f32[8,32], index: 1, kind: input, shape index: {}]
  %s2 = inlined_call_operand.vmem [shape: f32[1,8,128], index: 2, kind: output, shape index: {}]
  %s3 = sld [smem:[#allocation0]]
  $region26: #{_soft_ce_nomask_call.1} parent=0
    _
  %s5 = ssub.s32 1, %s3
  %s6 = scalar_select 0, %s5, %s3
  $region1: #{_soft_ce_nomask_call.1} parent=0
    #allocation2 [shape = 'u8[4096]{0}', space=vmem, size = 0x1000, scoped, tag = 'input window, operand 0, single buffered']
    #allocation3 [shape = 's32[1]{0}', space=sflag, size = 0x4, scoped, tag = 'scoped memory for _soft_ce_nomask_call.1']
    #allocation4 [shape = 'u8[4096]{0}', space=vmem, size = 0x1000, scoped, tag = 'input window, operand 1, single buffered']
    #allocation5 [shape = 's32[1]{0}', space=sflag, size = 0x4, scoped, tag = 'scoped memory for _soft_ce_nomask_call.1']
    %7 = vsyncpa [#allocation3], 0
    %8 = vsyncpa [#allocation5], 0
    // Predicated region
    $region2: #{_soft_ce_nomask_call.1} parent=1 // pred_check
      _
    $region3: #{_soft_ce_nomask_call.1} parent=1 // pred_check_branch
      %10 = sbr.rel (0) target = $region5
    $region4: #{_soft_ce_nomask_call.1} parent=1 // pred_region
      %s12 = ssub.s32 128, 128
      %13 = vsyncadd [#allocation3], %s12
      %s15 = sshll.u32 [#allocation2], 4
      %s16 = int_to_ptr.vmem [resolvable:$true] %s15
      %18 = dma.hbm_to_vmem [thread:$0]  %s0, 128, %s16, [#allocation3]
    $region5: #{_soft_ce_nomask_call.1} parent=1 // pred_fallthru
      _
    // Predicated region
    $region6: #{_soft_ce_nomask_call.1} parent=1 // pred_check
      _
    $region7: #{_soft_ce_nomask_call.1} parent=1 // pred_check_branch
      %20 = sbr.rel (0) target = $region9
    $region8: #{_soft_ce_nomask_call.1} parent=1 // pred_region
      %s22 = ssub.s32 128, 128
      %23 = vsyncadd [#allocation5], %s22
      %s25 = sshll.u32 [#allocation4], 4
      %s26 = int_to_ptr.vmem [resolvable:$true] %s25
      %28 = dma.hbm_to_vmem [thread:$0]  %s1, 128, %s26, [#allocation5]
    $region9: #{_soft_ce_nomask_call.1} parent=1 // pred_fallthru
      _
    // Predicated region
    $region10: #{_soft_ce_nomask_call.1} parent=1 // pred_check
      _
    $region11: #{_soft_ce_nomask_call.1} parent=1 // pred_check_branch
      %30 = sbr.rel (0) target = $region13
    $region12: #{_soft_ce_nomask_call.1} parent=1 // pred_region
      %31 = dma.done [#allocation3], 128
    $region13: #{_soft_ce_nomask_call.1} parent=1 // pred_fallthru
      _
    // Predicated region
    $region14: #{_soft_ce_nomask_call.1} parent=1 // pred_check
      _
    $region15: #{_soft_ce_nomask_call.1} parent=1 // pred_check_branch
      %33 = sbr.rel (0) target = $region17
    $region16: #{_soft_ce_nomask_call.1} parent=1 // pred_region
      %34 = dma.done [#allocation5], 128
    $region17: #{_soft_ce_nomask_call.1} parent=1 // pred_fallthru
      _
    %v35 = vld [vmem:[#allocation2] sm:$0xff]
    %v36 = vld [vmem:[#allocation4] sm:$0xff]
    %vm37 = vcmask 261120
    %v38 = vsel %vm37, %v35, -inf
    %39 = vmax.xlane.f32.xlu0 %v38
    %v40 = vpop.xlane.xlu0 %39
    %v41 = vsub.f32 %v35, %v40
    %v42 = vmul.f32 %v41, 1.442695
    %v43 = vpow.pop %v42
    %v44 = vsel %vm37, %v43, 0.0
    %45 = vadd.xlane.f32.xlu0 %v44
    %v46 = vpop.xlane.xlu0 %45
    %v47 = vlog2.pop %v46
    %v48 = vmul.f32 %v47, 0.6931472
    %v49 = vsel %vm37, %v36, -inf
    %50 = vmax.xlane.f32.xlu0 %v49
    %v51 = vpop.xlane.xlu0 %50
    %v52 = vsub.f32 %v36, %v51
    %v53 = vmul.f32 %v52, 1.442695
    %v54 = vpow.pop %v53
    %v55 = vsel %vm37, %v54, 0.0
    %56 = vadd.xlane.f32.xlu0 %v55
    %v57 = vpop.xlane.xlu0 %56
    %v58 = vmul.f32 %v41, %v54
    %v59 = vsel %vm37, %v58, 0.0
    %60 = vadd.xlane.f32.xlu0 %v59
    %v61 = vpop.xlane.xlu0 %60
    %v62 = vrcp.pop %v57
    %v63 = vmul.f32 %v61, %v62
    %v64 = vsub.f32 %v48, %v63
    %vm65 = vcmask 7168
    %v66 = vsel %vm65, %v64, 0.0
    %67 = vadd.xlane.f32.xlu0 %v66
    %v68 = vpop.xlane.xlu0 %67
    %v69 = vrot.slane %v68, 4
    %v70 = vadd.f32 %v68, %v69
    %v71 = vrot.slane %v70, 2
    %v72 = vadd.f32 %v70, %v71
    %v73 = vrot.slane %v72, 1
    %v74 = vadd.f32 %v72, %v73
    %s75 = vtos %v74
    %v76 = vstv %s75
    %77 = vst [vmem:[%s2] sm:$0xff] %v76
    // Predicated region
    $region18: #{_soft_ce_nomask_call.1} parent=1 // pred_check
      _
    $region19: #{_soft_ce_nomask_call.1} parent=1 // pred_check_branch
      %79 = sbr.rel (0) target = $region21
    $region20: #{_soft_ce_nomask_call.1} parent=1 // pred_region
      _
    $region21: #{_soft_ce_nomask_call.1} parent=1 // pred_fallthru
      _
    // Predicated region
    $region22: #{_soft_ce_nomask_call.1} parent=1 // pred_check
      _
    $region23: #{_soft_ce_nomask_call.1} parent=1 // pred_check_branch
      %81 = sbr.rel (0) target = $region25
    $region24: #{_soft_ce_nomask_call.1} parent=1 // pred_region
      _
    $region25: #{_soft_ce_nomask_call.1} parent=1 // pred_fallthru
      _
    %82 = vsyncpa [#allocation3], 1
    %83 = vsyncpa [#allocation5], 1

</llo_original>
